<compile_context>
chip_gen: v5e
topology: v5e:2x2
jax: 0.10.0
libtpu: 0.0.40
codegen_flags: <defaults>
</compile_context>

<pallas_src>
import jax
import jax.numpy as jnp
from jax import lax
from jax.experimental import pallas as pl
from jax.experimental.pallas import tpu as pltpu


def _split_dim_normalize_kernel(x_ref, o_ref, *, eps, scale):
    # x_ref / o_ref: (g_tile, D, t_hw) VMEM tiles.  Each leading row is one
    # (sample, class) group; L2-normalize over the D (sublane) axis
    # independently at every spatial position (lane), then scale.
    x = x_ref[...].astype(jnp.float32)                        # (g, D, t_hw)
    sq = jnp.sum(x * x, axis=1, keepdims=True)                # (g, 1, t_hw)  XLU
    inv = scale * lax.rsqrt(jnp.maximum(sq, eps * eps))       # EUP; == scale/clamp_min(norm,eps)
    # Re-read the input for the store so the full upcast block does not have to
    # stay live across the reduction (keeps vreg pressure / spill traffic low,
    # especially for bf16 inputs where the f32 upcast doubles the footprint).
    o_ref[...] = (x_ref[...].astype(jnp.float32) * inv).astype(o_ref.dtype)


def _sublane_pack(itemsize):
    # Sublane packing factor: f32 -> 8, bf16/f16 -> 16, int8/fp8 -> 32.
    return max(8, 32 // max(1, itemsize))


def _xla_split_dim_normalize(x, D, num_classes, eps, scale):
    # Plain-XLA path for tiny / sub-128-lane spatial extents.
    N, C, H, W = x.shape
    xg = x.reshape(N, num_classes, D, H, W).astype(jnp.float32)
    sq = jnp.sum(xg * xg, axis=2, keepdims=True)
    inv = scale * lax.rsqrt(jnp.maximum(sq, eps * eps))
    return (xg * inv).astype(x.dtype).reshape(N, C, H, W)


def ak_split_dim_normalize(x_nchw, dim_per_class=20, num_classes=9,
                           eps=1e-12, scale=0.1,
                           block_budget_bytes=4 * 1024 * 1024):
    """x_nchw: [N, C, H, W] with C == num_classes * dim_per_class."""
    N, C, H, W = x_nchw.shape
    D = dim_per_class
    assert C == num_classes * D
    G = N * num_classes
    HW = H * W
    itemsize = jnp.dtype(x_nchw.dtype).itemsize

    # Sub-128-lane spatial extent: every store would be a masked vst.msk and the
    # fixed per-grid-step overhead dominates; use the XLA path instead.
    if HW < 128:
        return _xla_split_dim_normalize(x_nchw, D, num_classes, eps, scale)

    # Free, row-major-compatible view: [N, num_classes*D, H, W] -> [G, D, HW].
    x_v = x_nchw.reshape(G, D, HW)

    # Lane tile: fixed multiple of 128 (lane-dense unmasked stores on all but the
    # last block), aimed at 512-2048 lanes; cdiv grid handles the remainder.
    t_hw = max(128, min(2048, (HW // 128) * 128))

    # Group tile: sized against the padded VMEM footprint (D pads up to the
    # sublane packing granularity of the dtype).
    sub = _sublane_pack(itemsize)
    d_pad = ((D + sub - 1) // sub) * sub
    per_group_block_bytes = d_pad * t_hw * itemsize
    g_tile = max(1, min(G, block_budget_bytes // per_group_block_bytes))

    # Prefer an even number of grid steps on the group axis (balanced work for
    # the two TensorCores on v7x); a single extra step is negligible elsewhere.
    g_steps = pl.cdiv(G, g_tile)
    if 1 < g_steps < 4 and (g_steps % 2 == 1):
        g_tile = pl.cdiv(G, g_steps + 1)
        g_steps = pl.cdiv(G, g_tile)

    grid = (g_steps, pl.cdiv(HW, t_hw))

    kernel = lambda x_ref, o_ref: _split_dim_normalize_kernel(
        x_ref, o_ref, eps=eps, scale=scale)

    total_elems = N * C * HW
    cost = pl.CostEstimate(
        flops=3 * total_elems,                # mul+add for sumsq, mul for scale
        transcendentals=G * HW,               # one rsqrt per (group, spatial pos)
        bytes_accessed=2 * total_elems * itemsize,
    )

    out_v = pl.pallas_call(
        kernel,
        out_shape=jax.ShapeDtypeStruct((G, D, HW), x_v.dtype),
        grid_spec=pltpu.PrefetchScalarGridSpec(
            num_scalar_prefetch=0,
            grid=grid,
            in_specs=[pl.BlockSpec((g_tile, D, t_hw), lambda i, j: (i, 0, j))],
            out_specs=pl.BlockSpec((g_tile, D, t_hw), lambda i, j: (i, 0, j)),
        ),
        compiler_params=pltpu.CompilerParams(
            dimension_semantics=("parallel", "parallel"),
            # ~4 MiB padded per block per array x 2 arrays x 2 buffers ~= 16 MiB;
            # 32 MiB fits every generation (v5e/v6e 128 MiB, v7x 64 MiB physical).
            vmem_limit_bytes=32 * 1024 * 1024,
        ),
        cost_estimate=cost,
    )(x_v)

    # Free view back to NCHW.
    return out_v.reshape(N, C, H, W)


def _reference(x_nchw, dim_per_class, num_classes, eps=1e-12, scale=0.1):
    """Pure-JAX reference mirroring the PyTorch module (for sanity check)."""
    D = dim_per_class
    chunks = []
    for c in range(num_classes):
        sl = x_nchw[:, c * D:(c + 1) * D]
        nrm = jnp.maximum(jnp.sqrt(jnp.sum(sl * sl, axis=1, keepdims=True)), eps)
        chunks.append(sl / nrm * scale)
    return jnp.concatenate(chunks, axis=1)


if __name__ == "__main__":
    dim_per_class = 20
    num_classes = 9
    N, H, W = 2, 16, 16                 # HW = 256 >= 128 -> exercises the Pallas path
    C = dim_per_class * num_classes     # 180

    key = jax.random.PRNGKey(0)
    x = jax.random.normal(key, (N, C, H, W), dtype=jnp.float32)

    out = ak_split_dim_normalize(x, dim_per_class=dim_per_class, num_classes=num_classes)
    out = jax.block_until_ready(out)

    ref = _reference(x, dim_per_class, num_classes)
    assert out.shape == (N, C, H, W)
    assert jnp.allclose(out, ref, atol=1e-5, rtol=1e-5)

    print("KERNEL_OK")
</pallas_src>

<mosaic_0001>
module attributes {stable_mosaic.version = 11 : i64} {
  func.func @_lambda_(%arg0: i32, %arg1: i32, %arg2: memref<18x20x256xf32, #tpu.memory_space<vmem>>, %arg3: memref<18x20x256xf32, #tpu.memory_space<vmem>>) attributes {dimension_semantics = [#tpu.dimension_semantics<parallel>, #tpu.dimension_semantics<parallel>], iteration_bounds = array<i64: 1, 1>, scalar_prefetch = 0 : i64, scratch_operands = 0 : i64, tpu.core_type = #tpu.core_type<tc>, window_params = [{transform_indices = @transform_0, window_bounds = array<i64: 18, 20, 256>}, {transform_indices = @transform_1, window_bounds = array<i64: 18, 20, 256>}]} {
    %c0 = arith.constant 0 : index
    %c0_0 = arith.constant 0 : index
    %c0_1 = arith.constant 0 : index
    %0 = vector.load %arg2[%c0, %c0_0, %c0_1] : memref<18x20x256xf32, #tpu.memory_space<vmem>>, vector<18x20x256xf32>
    %1 = arith.mulf %0, %0 : vector<18x20x256xf32>
    %cst = arith.constant dense<0.000000e+00> : vector<18x256xf32>
    %2 = vector.multi_reduction <add>, %1, %cst [1] : vector<18x20x256xf32> to vector<18x256xf32>
    %3 = vector.shape_cast %2 : vector<18x256xf32> to vector<18x1x256xf32>
    %cst_2 = arith.constant 1.000000e-24 : f32
    %4 = vector.broadcast %cst_2 : f32 to vector<18x1x256xf32>
    %5 = arith.maximumf %3, %4 : vector<18x1x256xf32>
    %6 = math.rsqrt %5 : vector<18x1x256xf32>
    %cst_3 = arith.constant 1.000000e-01 : f32
    %7 = vector.broadcast %cst_3 : f32 to vector<18x1x256xf32>
    %8 = arith.mulf %7, %6 : vector<18x1x256xf32>
    %c0_4 = arith.constant 0 : index
    %c0_5 = arith.constant 0 : index
    %c0_6 = arith.constant 0 : index
    %9 = vector.load %arg2[%c0_4, %c0_5, %c0_6] : memref<18x20x256xf32, #tpu.memory_space<vmem>>, vector<18x20x256xf32>
    %10 = vector.broadcast %8 : vector<18x1x256xf32> to vector<18x20x256xf32>
    %11 = arith.mulf %9, %10 : vector<18x20x256xf32>
    %c0_7 = arith.constant 0 : index
    %c0_8 = arith.constant 0 : index
    %c0_9 = arith.constant 0 : index
    %12 = vector.load %arg3[%c0_7, %c0_8, %c0_9] : memref<18x20x256xf32, #tpu.memory_space<vmem>>, vector<18x20x256xf32>
    tpu.vector_store %arg3[%c0_7, %c0_8, %c0_9], %11 {strides = array<i32>} : memref<18x20x256xf32, #tpu.memory_space<vmem>>, vector<18x20x256xf32>,
    return
  }
  func.func @transform_0(%arg0: i32, %arg1: i32) -> (i32, i32, i32) {
    %c0_i32 = arith.constant 0 : i32
    %c0_i32_0 = arith.constant 0 : i32
    return %arg0, %c0_i32, %arg1 : i32, i32, i32
  }
  func.func @transform_1(%arg0: i32, %arg1: i32) -> (i32, i32, i32) {
    %c0_i32 = arith.constant 0 : i32
    %c0_i32_0 = arith.constant 0 : i32
    return %arg0, %c0_i32, %arg1 : i32, i32, i32
  }
}

</mosaic_0001>

<llo_original>
// kernel: tpu_custom_call.1
$region0: #{tpu_custom_call.1}
  #allocation0 [shape = 'u32[]', space=smem, size = 0x4, offset = 0x4, fixed_abs, tag = 'smem constant byte address 0x4 - core index']
  #allocation1 [shape = 'u32[72,128]{1,0:T(1,128)}', space=vmem, size = 0x9000, scoped, tag = 'internal scratch']
  %s0 = inlined_call_operand.hbm [shape: f32[18,20,256], index: 0, kind: input, shape index: {}]
  %s1 = inlined_call_operand.hbm [shape: f32[18,20,256], index: 1, kind: output, shape index: {}]
  %s2 = sld [smem:[#allocation0]]
  $region18: #{tpu_custom_call.1} parent=0
    _
  %s4 = ssub.s32 1, %s2
  %s5 = scalar_select 0, %s4, %s2
  $region1: #{tpu_custom_call.1} parent=0
    #allocation2 [shape = 'u8[442368]{0}', space=vmem, size = 0x6c000, scoped, tag = 'input window, operand 0, single buffered']
    #allocation3 [shape = 's32[1]{0}', space=sflag, size = 0x4, scoped, tag = 'scoped memory for tpu_custom_call.1']
    #allocation4 [shape = 's32[1]{0}', space=sflag, size = 0x4, scoped, tag = 'scoped memory for tpu_custom_call.1']
    #allocation5 [shape = 'u8[442368]{0}', space=vmem, size = 0x6c000, scoped, tag = 'output window, operand 0, single buffered']
    %6 = vsyncpa [#allocation3], 0
    %7 = vsyncpa [#allocation4], 0
    // Predicated region
    $region2: #{tpu_custom_call.1} parent=1 // pred_check
      _
    $region3: #{tpu_custom_call.1} parent=1 // pred_check_branch
      %9 = sbr.rel (0) target = $region5
    $region4: #{tpu_custom_call.1} parent=1 // pred_region
      %11 = vsyncadd [#allocation3], 0
      %s12 = sshll.u32 %s0, 4
      %s13 = int_to_ptr.hbm [resolvable:$true] %s12
      %s14 = sshll.u32 [#allocation2], 4
      %s15 = int_to_ptr.vmem [resolvable:$true] %s14
      %20 = dma.hbm_to_vmem [thread:$0]  %s13, 13824, %s15, [#allocation3], 256, 256, 16
    $region5: #{tpu_custom_call.1} parent=1 // pred_fallthru
      _
    // Predicated region
    $region6: #{tpu_custom_call.1} parent=1 // pred_check
      _
    $region7: #{tpu_custom_call.1} parent=1 // pred_check_branch
      %22 = sbr.rel (0) target = $region9
    $region8: #{tpu_custom_call.1} parent=1 // pred_region
      %24 = dma.done [#allocation3], 13824
    $region9: #{tpu_custom_call.1} parent=1 // pred_fallthru
      _
    %v25 = vld [vmem:[#allocation2] sm:$0xff]
    %v26 = vld [vmem:[#allocation2 + $0x8] sm:$0xff]
    %v27 = vld [vmem:[#allocation2 + $0x10] sm:$0xff]
    %v28 = vld [vmem:[#allocation2 + $0x18] sm:$0xff]
    %v29 = vld [vmem:[#allocation2 + $0x20] sm:$0xf]
    %v30 = vld [vmem:[#allocation2 + $0x28] sm:$0xf]
    %v31 = vld [vmem:[#allocation2 + $0x30] sm:$0xff]
    %v32 = vld [vmem:[#allocation2 + $0x38] sm:$0xff]
    %v33 = vld [vmem:[#allocation2 + $0x40] sm:$0xff]
    %v34 = vld [vmem:[#allocation2 + $0x48] sm:$0xff]
    %v35 = vld [vmem:[#allocation2 + $0x50] sm:$0xf]
    %v36 = vld [vmem:[#allocation2 + $0x58] sm:$0xf]
    %v37 = vld [vmem:[#allocation2 + $0x60] sm:$0xff]
    %v38 = vld [vmem:[#allocation2 + $0x68] sm:$0xff]
    %v39 = vld [vmem:[#allocation2 + $0x70] sm:$0xff]
    %v40 = vld [vmem:[#allocation2 + $0x78] sm:$0xff]
    %v41 = vld [vmem:[#allocation2 + $0x80] sm:$0xf]
    %v42 = vld [vmem:[#allocation2 + $0x88] sm:$0xf]
    %v43 = vld [vmem:[#allocation2 + $0x90] sm:$0xff]
    %v44 = vld [vmem:[#allocation2 + $0x98] sm:$0xff]
    %v45 = vld [vmem:[#allocation2 + $0xa0] sm:$0xff]
    %v46 = vld [vmem:[#allocation2 + $0xa8] sm:$0xff]
    %v47 = vld [vmem:[#allocation2 + $0xb0] sm:$0xf]
    %v48 = vld [vmem:[#allocation2 + $0xb8] sm:$0xf]
    %v49 = vld [vmem:[#allocation2 + $0xc0] sm:$0xff]
    %v50 = vld [vmem:[#allocation2 + $0xc8] sm:$0xff]
    %v51 = vld [vmem:[#allocation2 + $0xd0] sm:$0xff]
    %v52 = vld [vmem:[#allocation2 + $0xd8] sm:$0xff]
    %v53 = vld [vmem:[#allocation2 + $0xe0] sm:$0xf]
    %v54 = vld [vmem:[#allocation2 + $0xe8] sm:$0xf]
    %v55 = vld [vmem:[#allocation2 + $0xf0] sm:$0xff]
    %v56 = vld [vmem:[#allocation2 + $0xf8] sm:$0xff]
    %v57 = vld [vmem:[#allocation2 + $0x100] sm:$0xff]
    %v58 = vld [vmem:[#allocation2 + $0x108] sm:$0xff]
    %v59 = vld [vmem:[#allocation2 + $0x110] sm:$0xf]
    %v60 = vld [vmem:[#allocation2 + $0x118] sm:$0xf]
    %v61 = vld [vmem:[#allocation2 + $0x120] sm:$0xff]
    %v62 = vld [vmem:[#allocation2 + $0x128] sm:$0xff]
    %v63 = vld [vmem:[#allocation2 + $0x130] sm:$0xff]
    %v64 = vld [vmem:[#allocation2 + $0x138] sm:$0xff]
    %v65 = vld [vmem:[#allocation2 + $0x140] sm:$0xf]
    %v66 = vld [vmem:[#allocation2 + $0x148] sm:$0xf]
    %v67 = vld [vmem:[#allocation2 + $0x150] sm:$0xff]
    %v68 = vld [vmem:[#allocation2 + $0x158] sm:$0xff]
    %v69 = vld [vmem:[#allocation2 + $0x160] sm:$0xff]
    %v70 = vld [vmem:[#allocation2 + $0x168] sm:$0xff]
    %v71 = vld [vmem:[#allocation2 + $0x170] sm:$0xf]
    %v72 = vld [vmem:[#allocation2 + $0x178] sm:$0xf]
    %v73 = vld [vmem:[#allocation2 + $0x180] sm:$0xff]
    %v74 = vld [vmem:[#allocation2 + $0x188] sm:$0xff]
    %v75 = vld [vmem:[#allocation2 + $0x190] sm:$0xff]
    %v76 = vld [vmem:[#allocation2 + $0x198] sm:$0xff]
    %v77 = vld [vmem:[#allocation2 + $0x1a0] sm:$0xf]
    %v78 = vld [vmem:[#allocation2 + $0x1a8] sm:$0xf]
    %v79 = vld [vmem:[#allocation2 + $0x1b0] sm:$0xff]
    %v80 = vld [vmem:[#allocation2 + $0x1b8] sm:$0xff]
    %v81 = vld [vmem:[#allocation2 + $0x1c0] sm:$0xff]
    %v82 = vld [vmem:[#allocation2 + $0x1c8] sm:$0xff]
    %v83 = vld [vmem:[#allocation2 + $0x1d0] sm:$0xf]
    %v84 = vld [vmem:[#allocation2 + $0x1d8] sm:$0xf]
    %v85 = vld [vmem:[#allocation2 + $0x1e0] sm:$0xff]
    %v86 = vld [vmem:[#allocation2 + $0x1e8] sm:$0xff]
    %v87 = vld [vmem:[#allocation2 + $0x1f0] sm:$0xff]
    %v88 = vld [vmem:[#allocation2 + $0x1f8] sm:$0xff]
    %v89 = vld [vmem:[#allocation2 + $0x200] sm:$0xf]
    %v90 = vld [vmem:[#allocation2 + $0x208] sm:$0xf]
    %v91 = vld [vmem:[#allocation2 + $0x210] sm:$0xff]
    %v92 = vld [vmem:[#allocation2 + $0x218] sm:$0xff]
    %v93 = vld [vmem:[#allocation2 + $0x220] sm:$0xff]
    %v94 = vld [vmem:[#allocation2 + $0x228] sm:$0xff]
    %v95 = vld [vmem:[#allocation2 + $0x230] sm:$0xf]
    %v96 = vld [vmem:[#allocation2 + $0x238] sm:$0xf]
    %v97 = vld [vmem:[#allocation2 + $0x240] sm:$0xff]
    %v98 = vld [vmem:[#allocation2 + $0x248] sm:$0xff]
    %v99 = vld [vmem:[#allocation2 + $0x250] sm:$0xff]
    %v100 = vld [vmem:[#allocation2 + $0x258] sm:$0xff]
    %v101 = vld [vmem:[#allocation2 + $0x260] sm:$0xf]
    %v102 = vld [vmem:[#allocation2 + $0x268] sm:$0xf]
    %v103 = vld [vmem:[#allocation2 + $0x270] sm:$0xff]
    %v104 = vld [vmem:[#allocation2 + $0x278] sm:$0xff]
    %v105 = vld [vmem:[#allocation2 + $0x280] sm:$0xff]
    %v106 = vld [vmem:[#allocation2 + $0x288] sm:$0xff]
    %v107 = vld [vmem:[#allocation2 + $0x290] sm:$0xf]
    %v108 = vld [vmem:[#allocation2 + $0x298] sm:$0xf]
    %v109 = vld [vmem:[#allocation2 + $0x2a0] sm:$0xff]
    %v110 = vld [vmem:[#allocation2 + $0x2a8] sm:$0xff]
    %v111 = vld [vmem:[#allocation2 + $0x2b0] sm:$0xff]
    %v112 = vld [vmem:[#allocation2 + $0x2b8] sm:$0xff]
    %v113 = vld [vmem:[#allocation2 + $0x2c0] sm:$0xf]
    %v114 = vld [vmem:[#allocation2 + $0x2c8] sm:$0xf]
    %v115 = vld [vmem:[#allocation2 + $0x2d0] sm:$0xff]
    %v116 = vld [vmem:[#allocation2 + $0x2d8] sm:$0xff]
    %v117 = vld [vmem:[#allocation2 + $0x2e0] sm:$0xff]
    %v118 = vld [vmem:[#allocation2 + $0x2e8] sm:$0xff]
    %v119 = vld [vmem:[#allocation2 + $0x2f0] sm:$0xf]
    %v120 = vld [vmem:[#allocation2 + $0x2f8] sm:$0xf]
    %v121 = vld [vmem:[#allocation2 + $0x300] sm:$0xff]
    %v122 = vld [vmem:[#allocation2 + $0x308] sm:$0xff]
    %v123 = vld [vmem:[#allocation2 + $0x310] sm:$0xff]
    %v124 = vld [vmem:[#allocation2 + $0x318] sm:$0xff]
    %v125 = vld [vmem:[#allocation2 + $0x320] sm:$0xf]
    %v126 = vld [vmem:[#allocation2 + $0x328] sm:$0xf]
    %v127 = vld [vmem:[#allocation2 + $0x330] sm:$0xff]
    %v128 = vld [vmem:[#allocation2 + $0x338] sm:$0xff]
    %v129 = vld [vmem:[#allocation2 + $0x340] sm:$0xff]
    %v130 = vld [vmem:[#allocation2 + $0x348] sm:$0xff]
    %v131 = vld [vmem:[#allocation2 + $0x350] sm:$0xf]
    %v132 = vld [vmem:[#allocation2 + $0x358] sm:$0xf]
    %v133 = vmul.f32 %v25, %v25
    %v134 = vmul.f32 %v26, %v26
    %v135 = vmul.f32 %v27, %v27
    %v136 = vmul.f32 %v28, %v28
    %v137 = vmul.f32 %v29, %v29
    %v138 = vmul.f32 %v30, %v30
    %v139 = vmul.f32 %v31, %v31
    %v140 = vmul.f32 %v32, %v32
    %v141 = vmul.f32 %v33, %v33
    %v142 = vmul.f32 %v34, %v34
    %v143 = vmul.f32 %v35, %v35
    %v144 = vmul.f32 %v36, %v36
    %v145 = vmul.f32 %v37, %v37
    %v146 = vmul.f32 %v38, %v38
    %v147 = vmul.f32 %v39, %v39
    %v148 = vmul.f32 %v40, %v40
    %v149 = vmul.f32 %v41, %v41
    %v150 = vmul.f32 %v42, %v42
    %v151 = vmul.f32 %v43, %v43
    %v152 = vmul.f32 %v44, %v44
    %v153 = vmul.f32 %v45, %v45
    %v154 = vmul.f32 %v46, %v46
    %v155 = vmul.f32 %v47, %v47
    %v156 = vmul.f32 %v48, %v48
    %v157 = vmul.f32 %v49, %v49
    %v158 = vmul.f32 %v50, %v50
    %v159 = vmul.f32 %v51, %v51
    %v160 = vmul.f32 %v52, %v52
    %v161 = vmul.f32 %v53, %v53
    %v162 = vmul.f32 %v54, %v54
    %v163 = vmul.f32 %v55, %v55
    %v164 = vmul.f32 %v56, %v56
    %v165 = vmul.f32 %v57, %v57
    %v166 = vmul.f32 %v58, %v58
    %v167 = vmul.f32 %v59, %v59
    %v168 = vmul.f32 %v60, %v60
    %v169 = vmul.f32 %v61, %v61
    %v170 = vmul.f32 %v62, %v62
    %v171 = vmul.f32 %v63, %v63
    %v172 = vmul.f32 %v64, %v64
    %v173 = vmul.f32 %v65, %v65
    %v174 = vmul.f32 %v66, %v66
    %v175 = vmul.f32 %v67, %v67
    %v176 = vmul.f32 %v68, %v68
    %v177 = vmul.f32 %v69, %v69
    %v178 = vmul.f32 %v70, %v70
    %v179 = vmul.f32 %v71, %v71
    %v180 = vmul.f32 %v72, %v72
    %v181 = vmul.f32 %v73, %v73
    %v182 = vmul.f32 %v74, %v74
    %v183 = vmul.f32 %v75, %v75
    %v184 = vmul.f32 %v76, %v76
    %v185 = vmul.f32 %v77, %v77
    %v186 = vmul.f32 %v78, %v78
    %v187 = vmul.f32 %v79, %v79
    %v188 = vmul.f32 %v80, %v80
    %v189 = vmul.f32 %v81, %v81
    %v190 = vmul.f32 %v82, %v82
    %v191 = vmul.f32 %v83, %v83
    %v192 = vmul.f32 %v84, %v84
    %v193 = vmul.f32 %v85, %v85
    %v194 = vmul.f32 %v86, %v86
    %v195 = vmul.f32 %v87, %v87
    %v196 = vmul.f32 %v88, %v88
    %v197 = vmul.f32 %v89, %v89
    %v198 = vmul.f32 %v90, %v90
    %v199 = vmul.f32 %v91, %v91
    %v200 = vmul.f32 %v92, %v92
    %v201 = vmul.f32 %v93, %v93
    %v202 = vmul.f32 %v94, %v94
    %v203 = vmul.f32 %v95, %v95
    %v204 = vmul.f32 %v96, %v96
    %v205 = vmul.f32 %v97, %v97
    %v206 = vmul.f32 %v98, %v98
    %v207 = vmul.f32 %v99, %v99
    %v208 = vmul.f32 %v100, %v100
    %v209 = vmul.f32 %v101, %v101
    %v210 = vmul.f32 %v102, %v102
    %v211 = vmul.f32 %v103, %v103
    %v212 = vmul.f32 %v104, %v104
    %v213 = vmul.f32 %v105, %v105
    %v214 = vmul.f32 %v106, %v106
    %v215 = vmul.f32 %v107, %v107
    %v216 = vmul.f32 %v108, %v108
    %v217 = vmul.f32 %v109, %v109
    %v218 = vmul.f32 %v110, %v110
    %v219 = vmul.f32 %v111, %v111
    %v220 = vmul.f32 %v112, %v112
    %v221 = vmul.f32 %v113, %v113
    %v222 = vmul.f32 %v114, %v114
    %v223 = vmul.f32 %v115, %v115
    %v224 = vmul.f32 %v116, %v116
    %v225 = vmul.f32 %v117, %v117
    %v226 = vmul.f32 %v118, %v118
    %v227 = vmul.f32 %v119, %v119
    %v228 = vmul.f32 %v120, %v120
    %v229 = vmul.f32 %v121, %v121
    %v230 = vmul.f32 %v122, %v122
    %v231 = vmul.f32 %v123, %v123
    %v232 = vmul.f32 %v124, %v124
    %v233 = vmul.f32 %v125, %v125
    %v234 = vmul.f32 %v126, %v126
    %v235 = vmul.f32 %v127, %v127
    %v236 = vmul.f32 %v128, %v128
    %v237 = vmul.f32 %v129, %v129
    %v238 = vmul.f32 %v130, %v130
    %v239 = vmul.f32 %v131, %v131
    %v240 = vmul.f32 %v132, %v132
    %v241 = vadd.f32 %v133, %v135
    %vm242 = vcmask 1043456
    %v243 = vsel %vm242, %v137, 0.0
    %v244 = vadd.f32 %v241, %v243
    %v245 = vrot.slane %v244, 4
    %v246 = vadd.f32 %v244, %v245
    %v247 = vrot.slane %v246, 2
    %v248 = vadd.f32 %v246, %v247
    %v249 = vrot.slane %v248, 1
    %v250 = vadd.f32 %v248, %v249
    %v251 = vadd.f32 %v134, %v136
    %v252 = vsel %vm242, %v138, 0.0
    %v253 = vadd.f32 %v251, %v252
    %v254 = vrot.slane %v253, 4
    %v255 = vadd.f32 %v253, %v254
    %v256 = vrot.slane %v255, 2
    %v257 = vadd.f32 %v255, %v256
    %v258 = vrot.slane %v257, 1
    %v259 = vadd.f32 %v257, %v258
    %v260 = vadd.f32 %v139, %v141
    %v261 = vsel %vm242, %v143, 0.0
    %v262 = vadd.f32 %v260, %v261
    %v263 = vrot.slane %v262, 4
    %v264 = vadd.f32 %v262, %v263
    %v265 = vrot.slane %v264, 2
    %v266 = vadd.f32 %v264, %v265
    %v267 = vrot.slane %v266, 1
    %v268 = vadd.f32 %v266, %v267
    %v269 = vadd.f32 %v140, %v142
    %v270 = vsel %vm242, %v144, 0.0
    %v271 = vadd.f32 %v269, %v270
    %v272 = vrot.slane %v271, 4
    %v273 = vadd.f32 %v271, %v272
    %v274 = vrot.slane %v273, 2
    %v275 = vadd.f32 %v273, %v274
    %v276 = vrot.slane %v275, 1
    %v277 = vadd.f32 %v275, %v276
    %v278 = vadd.f32 %v145, %v147
    %v279 = vsel %vm242, %v149, 0.0
    %v280 = vadd.f32 %v278, %v279
    %v281 = vrot.slane %v280, 4
    %v282 = vadd.f32 %v280, %v281
    %v283 = vrot.slane %v282, 2
    %v284 = vadd.f32 %v282, %v283
    %v285 = vrot.slane %v284, 1
    %v286 = vadd.f32 %v284, %v285
    %v287 = vadd.f32 %v146, %v148
    %v288 = vsel %vm242, %v150, 0.0
    %v289 = vadd.f32 %v287, %v288
    %v290 = vrot.slane %v289, 4
    %v291 = vadd.f32 %v289, %v290
    %v292 = vrot.slane %v291, 2
    %v293 = vadd.f32 %v291, %v292
    %v294 = vrot.slane %v293, 1
    %v295 = vadd.f32 %v293, %v294
    %v296 = vadd.f32 %v151, %v153
    %v297 = vsel %vm242, %v155, 0.0
    %v298 = vadd.f32 %v296, %v297
    %v299 = vrot.slane %v298, 4
    %v300 = vadd.f32 %v298, %v299
    %v301 = vrot.slane %v300, 2
    %v302 = vadd.f32 %v300, %v301
    %v303 = vrot.slane %v302, 1
    %v304 = vadd.f32 %v302, %v303
    %v305 = vadd.f32 %v152, %v154
    %v306 = vsel %vm242, %v156, 0.0
    %v307 = vadd.f32 %v305, %v306
    %v308 = vrot.slane %v307, 4
    %v309 = vadd.f32 %v307, %v308
    %v310 = vrot.slane %v309, 2
    %v311 = vadd.f32 %v309, %v310
    %v312 = vrot.slane %v311, 1
    %v313 = vadd.f32 %v311, %v312
    %v314 = vadd.f32 %v157, %v159
    %v315 = vsel %vm242, %v161, 0.0
    %v316 = vadd.f32 %v314, %v315
    %v317 = vrot.slane %v316, 4
    %v318 = vadd.f32 %v316, %v317
    %v319 = vrot.slane %v318, 2
    %v320 = vadd.f32 %v318, %v319
    %v321 = vrot.slane %v320, 1
    %v322 = vadd.f32 %v320, %v321
    %v323 = vadd.f32 %v158, %v160
    %v324 = vsel %vm242, %v162, 0.0
    %v325 = vadd.f32 %v323, %v324
    %v326 = vrot.slane %v325, 4
    %v327 = vadd.f32 %v325, %v326
    %v328 = vrot.slane %v327, 2
    %v329 = vadd.f32 %v327, %v328
    %v330 = vrot.slane %v329, 1
    %v331 = vadd.f32 %v329, %v330
    %v332 = vadd.f32 %v163, %v165
    %v333 = vsel %vm242, %v167, 0.0
    %v334 = vadd.f32 %v332, %v333
    %v335 = vrot.slane %v334, 4
    %v336 = vadd.f32 %v334, %v335
    %v337 = vrot.slane %v336, 2
    %v338 = vadd.f32 %v336, %v337
    %v339 = vrot.slane %v338, 1
    %v340 = vadd.f32 %v338, %v339
    %v341 = vadd.f32 %v164, %v166
    %v342 = vsel %vm242, %v168, 0.0
    %v343 = vadd.f32 %v341, %v342
    %v344 = vrot.slane %v343, 4
    %v345 = vadd.f32 %v343, %v344
    %v346 = vrot.slane %v345, 2
    %v347 = vadd.f32 %v345, %v346
    %v348 = vrot.slane %v347, 1
    %v349 = vadd.f32 %v347, %v348
    %v350 = vadd.f32 %v169, %v171
    %v351 = vsel %vm242, %v173, 0.0
    %v352 = vadd.f32 %v350, %v351
    %v353 = vrot.slane %v352, 4
    %v354 = vadd.f32 %v352, %v353
    %v355 = vrot.slane %v354, 2
    %v356 = vadd.f32 %v354, %v355
    %v357 = vrot.slane %v356, 1
    %v358 = vadd.f32 %v356, %v357
    %v359 = vadd.f32 %v170, %v172
    %v360 = vsel %vm242, %v174, 0.0
    %v361 = vadd.f32 %v359, %v360
    %v362 = vrot.slane %v361, 4
    %v363 = vadd.f32 %v361, %v362
    %v364 = vrot.slane %v363, 2
    %v365 = vadd.f32 %v363, %v364
    %v366 = vrot.slane %v365, 1
    %v367 = vadd.f32 %v365, %v366
    %v368 = vadd.f32 %v175, %v177
    %v369 = vsel %vm242, %v179, 0.0
    %v370 = vadd.f32 %v368, %v369
    %v371 = vrot.slane %v370, 4
    %v372 = vadd.f32 %v370, %v371
    %v373 = vrot.slane %v372, 2
    %v374 = vadd.f32 %v372, %v373
    %v375 = vrot.slane %v374, 1
    %v376 = vadd.f32 %v374, %v375
    %v377 = vadd.f32 %v176, %v178
    %v378 = vsel %vm242, %v180, 0.0
    %v379 = vadd.f32 %v377, %v378
    %v380 = vrot.slane %v379, 4
    %v381 = vadd.f32 %v379, %v380
    %v382 = vrot.slane %v381, 2
    %v383 = vadd.f32 %v381, %v382
    %v384 = vrot.slane %v383, 1
    %v385 = vadd.f32 %v383, %v384
    %v386 = vadd.f32 %v181, %v183
    %v387 = vsel %vm242, %v185, 0.0
    %v388 = vadd.f32 %v386, %v387
    %v389 = vrot.slane %v388, 4
    %v390 = vadd.f32 %v388, %v389
    %v391 = vrot.slane %v390, 2
    %v392 = vadd.f32 %v390, %v391
    %v393 = vrot.slane %v392, 1
    %v394 = vadd.f32 %v392, %v393
    %v395 = vadd.f32 %v182, %v184
    %v396 = vsel %vm242, %v186, 0.0
    %v397 = vadd.f32 %v395, %v396
    %v398 = vrot.slane %v397, 4
    %v399 = vadd.f32 %v397, %v398
    %v400 = vrot.slane %v399, 2
    %v401 = vadd.f32 %v399, %v400
    %v402 = vrot.slane %v401, 1
    %v403 = vadd.f32 %v401, %v402
    %v404 = vadd.f32 %v187, %v189
    %v405 = vsel %vm242, %v191, 0.0
    %v406 = vadd.f32 %v404, %v405
    %v407 = vrot.slane %v406, 4
    %v408 = vadd.f32 %v406, %v407
    %v409 = vrot.slane %v408, 2
    %v410 = vadd.f32 %v408, %v409
    %v411 = vrot.slane %v410, 1
    %v412 = vadd.f32 %v410, %v411
    %v413 = vadd.f32 %v188, %v190
    %v414 = vsel %vm242, %v192, 0.0
    %v415 = vadd.f32 %v413, %v414
    %v416 = vrot.slane %v415, 4
    %v417 = vadd.f32 %v415, %v416
    %v418 = vrot.slane %v417, 2
    %v419 = vadd.f32 %v417, %v418
    %v420 = vrot.slane %v419, 1
    %v421 = vadd.f32 %v419, %v420
    %v422 = vadd.f32 %v193, %v195
    %v423 = vsel %vm242, %v197, 0.0
    %v424 = vadd.f32 %v422, %v423
    %v425 = vrot.slane %v424, 4
    %v426 = vadd.f32 %v424, %v425
    %v427 = vrot.slane %v426, 2
    %v428 = vadd.f32 %v426, %v427
    %v429 = vrot.slane %v428, 1
    %v430 = vadd.f32 %v428, %v429
    %v431 = vadd.f32 %v194, %v196
    %v432 = vsel %vm242, %v198, 0.0
    %v433 = vadd.f32 %v431, %v432
    %v434 = vrot.slane %v433, 4
    %v435 = vadd.f32 %v433, %v434
    %v436 = vrot.slane %v435, 2
    %v437 = vadd.f32 %v435, %v436
    %v438 = vrot.slane %v437, 1
    %v439 = vadd.f32 %v437, %v438
    %v440 = vadd.f32 %v199, %v201
    %v441 = vsel %vm242, %v203, 0.0
    %v442 = vadd.f32 %v440, %v441
    %v443 = vrot.slane %v442, 4
    %v444 = vadd.f32 %v442, %v443
    %v445 = vrot.slane %v444, 2
    %v446 = vadd.f32 %v444, %v445
    %v447 = vrot.slane %v446, 1
    %v448 = vadd.f32 %v446, %v447
    %v449 = vadd.f32 %v200, %v202
    %v450 = vsel %vm242, %v204, 0.0
    %v451 = vadd.f32 %v449, %v450
    %v452 = vrot.slane %v451, 4
    %v453 = vadd.f32 %v451, %v452
    %v454 = vrot.slane %v453, 2
    %v455 = vadd.f32 %v453, %v454
    %v456 = vrot.slane %v455, 1
    %v457 = vadd.f32 %v455, %v456
    %v458 = vadd.f32 %v205, %v207
    %v459 = vsel %vm242, %v209, 0.0
    %v460 = vadd.f32 %v458, %v459
    %v461 = vrot.slane %v460, 4
    %v462 = vadd.f32 %v460, %v461
    %v463 = vrot.slane %v462, 2
    %v464 = vadd.f32 %v462, %v463
    %v465 = vrot.slane %v464, 1
    %v466 = vadd.f32 %v464, %v465
    %v467 = vadd.f32 %v206, %v208
    %v468 = vsel %vm242, %v210, 0.0
    %v469 = vadd.f32 %v467, %v468
    %v470 = vrot.slane %v469, 4
    %v471 = vadd.f32 %v469, %v470
    %v472 = vrot.slane %v471, 2
    %v473 = vadd.f32 %v471, %v472
    %v474 = vrot.slane %v473, 1
    %v475 = vadd.f32 %v473, %v474
    %v476 = vadd.f32 %v211, %v213
    %v477 = vsel %vm242, %v215, 0.0
    %v478 = vadd.f32 %v476, %v477
    %v479 = vrot.slane %v478, 4
    %v480 = vadd.f32 %v478, %v479
    %v481 = vrot.slane %v480, 2
    %v482 = vadd.f32 %v480, %v481
    %v483 = vrot.slane %v482, 1
    %v484 = vadd.f32 %v482, %v483
    %v485 = vadd.f32 %v212, %v214
    %v486 = vsel %vm242, %v216, 0.0
    %v487 = vadd.f32 %v485, %v486
    %v488 = vrot.slane %v487, 4
    %v489 = vadd.f32 %v487, %v488
    %v490 = vrot.slane %v489, 2
    %v491 = vadd.f32 %v489, %v490
    %v492 = vrot.slane %v491, 1
    %v493 = vadd.f32 %v491, %v492
    %v494 = vadd.f32 %v217, %v219
    %v495 = vsel %vm242, %v221, 0.0
    %v496 = vadd.f32 %v494, %v495
    %v497 = vrot.slane %v496, 4
    %v498 = vadd.f32 %v496, %v497
    %v499 = vrot.slane %v498, 2
    %v500 = vadd.f32 %v498, %v499
    %v501 = vrot.slane %v500, 1
    %v502 = vadd.f32 %v500, %v501
    %v503 = vadd.f32 %v218, %v220
    %v504 = vsel %vm242, %v222, 0.0
    %v505 = vadd.f32 %v503, %v504
    %v506 = vrot.slane %v505, 4
    %v507 = vadd.f32 %v505, %v506
    %v508 = vrot.slane %v507, 2
    %v509 = vadd.f32 %v507, %v508
    %v510 = vrot.slane %v509, 1
    %v511 = vadd.f32 %v509, %v510
    %v512 = vadd.f32 %v223, %v225
    %v513 = vsel %vm242, %v227, 0.0
    %v514 = vadd.f32 %v512, %v513
    %v515 = vrot.slane %v514, 4
    %v516 = vadd.f32 %v514, %v515
    %v517 = vrot.slane %v516, 2
    %v518 = vadd.f32 %v516, %v517
    %v519 = vrot.slane %v518, 1
    %v520 = vadd.f32 %v518, %v519
    %v521 = vadd.f32 %v224, %v226
    %v522 = vsel %vm242, %v228, 0.0
    %v523 = vadd.f32 %v521, %v522
    %v524 = vrot.slane %v523, 4
    %v525 = vadd.f32 %v523, %v524
    %v526 = vrot.slane %v525, 2
    %v527 = vadd.f32 %v525, %v526
    %v528 = vrot.slane %v527, 1
    %v529 = vadd.f32 %v527, %v528
    %v530 = vadd.f32 %v229, %v231
    %v531 = vsel %vm242, %v233, 0.0
    %v532 = vadd.f32 %v530, %v531
    %v533 = vrot.slane %v532, 4
    %v534 = vadd.f32 %v532, %v533
    %v535 = vrot.slane %v534, 2
    %v536 = vadd.f32 %v534, %v535
    %v537 = vrot.slane %v536, 1
    %v538 = vadd.f32 %v536, %v537
    %v539 = vadd.f32 %v230, %v232
    %v540 = vsel %vm242, %v234, 0.0
    %v541 = vadd.f32 %v539, %v540
    %v542 = vrot.slane %v541, 4
    %v543 = vadd.f32 %v541, %v542
    %v544 = vrot.slane %v543, 2
    %v545 = vadd.f32 %v543, %v544
    %v546 = vrot.slane %v545, 1
    %v547 = vadd.f32 %v545, %v546
    %v548 = vadd.f32 %v235, %v237
    %v549 = vsel %vm242, %v239, 0.0
    %v550 = vadd.f32 %v548, %v549
    %v551 = vrot.slane %v550, 4
    %v552 = vadd.f32 %v550, %v551
    %v553 = vrot.slane %v552, 2
    %v554 = vadd.f32 %v552, %v553
    %v555 = vrot.slane %v554, 1
    %v556 = vadd.f32 %v554, %v555
    %v557 = vadd.f32 %v236, %v238
    %v558 = vsel %vm242, %v240, 0.0
    %v559 = vadd.f32 %v557, %v558
    %v560 = vrot.slane %v559, 4
    %v561 = vadd.f32 %v559, %v560
    %v562 = vrot.slane %v561, 2
    %v563 = vadd.f32 %v561, %v562
    %v564 = vrot.slane %v563, 1
    %v565 = vadd.f32 %v563, %v564
    %v566 = vmax.f32 %v250, 1e-24
    %v567 = vmax.f32 %v259, 1e-24
    %v568 = vmax.f32 %v268, 1e-24
    %v569 = vmax.f32 %v277, 1e-24
    %v570 = vmax.f32 %v286, 1e-24
    %v571 = vmax.f32 %v295, 1e-24
    %v572 = vmax.f32 %v304, 1e-24
    %v573 = vmax.f32 %v313, 1e-24
    %v574 = vmax.f32 %v322, 1e-24
    %v575 = vmax.f32 %v331, 1e-24
    %v576 = vmax.f32 %v340, 1e-24
    %v577 = vmax.f32 %v349, 1e-24
    %v578 = vmax.f32 %v358, 1e-24
    %v579 = vmax.f32 %v367, 1e-24
    %v580 = vmax.f32 %v376, 1e-24
    %v581 = vmax.f32 %v385, 1e-24
    %v582 = vmax.f32 %v394, 1e-24
    %v583 = vmax.f32 %v403, 1e-24
    %v584 = vmax.f32 %v412, 1e-24
    %v585 = vmax.f32 %v421, 1e-24
    %v586 = vmax.f32 %v430, 1e-24
    %v587 = vmax.f32 %v439, 1e-24
    %v588 = vmax.f32 %v448, 1e-24
    %v589 = vmax.f32 %v457, 1e-24
    %v590 = vmax.f32 %v466, 1e-24
    %v591 = vmax.f32 %v475, 1e-24
    %v592 = vmax.f32 %v484, 1e-24
    %v593 = vmax.f32 %v493, 1e-24
    %v594 = vmax.f32 %v502, 1e-24
    %v595 = vmax.f32 %v511, 1e-24
    %v596 = vmax.f32 %v520, 1e-24
    %v597 = vmax.f32 %v529, 1e-24
    %v598 = vmax.f32 %v538, 1e-24
    %v599 = vmax.f32 %v547, 1e-24
    %v600 = vmax.f32 %v556, 1e-24
    %v601 = vmax.f32 %v565, 1e-24
    %v602 = vrsqrt.pop %v566
    %v603 = vmul.f32 %v602, %v566
    %v604 = vmul.f32 %v603, %v602
    %v605 = vmul.f32 0.5, %v604
    %v606 = vsub.f32 1.5, %v605
    %v607 = vmul.f32 %v602, %v606
    %vm608 = vweird.f32 %v566
    %vm609 = vweird.f32 %v602
    %vm610 = vmor %vm608, %vm609
    %v611 = vsel %vm610, %v602, %v607
    %v612 = vrsqrt.pop %v567
    %v613 = vmul.f32 %v612, %v567
    %v614 = vmul.f32 %v613, %v612
    %v615 = vmul.f32 0.5, %v614
    %v616 = vsub.f32 1.5, %v615
    %v617 = vmul.f32 %v612, %v616
    %vm618 = vweird.f32 %v567
    %vm619 = vweird.f32 %v612
    %vm620 = vmor %vm618, %vm619
    %v621 = vsel %vm620, %v612, %v617
    %v622 = vrsqrt.pop %v568
    %v623 = vmul.f32 %v622, %v568
    %v624 = vmul.f32 %v623, %v622
    %v625 = vmul.f32 0.5, %v624
    %v626 = vsub.f32 1.5, %v625
    %v627 = vmul.f32 %v622, %v626
    %vm628 = vweird.f32 %v568
    %vm629 = vweird.f32 %v622
    %vm630 = vmor %vm628, %vm629
    %v631 = vsel %vm630, %v622, %v627
    %v632 = vrsqrt.pop %v569
    %v633 = vmul.f32 %v632, %v569
    %v634 = vmul.f32 %v633, %v632
    %v635 = vmul.f32 0.5, %v634
    %v636 = vsub.f32 1.5, %v635
    %v637 = vmul.f32 %v632, %v636
    %vm638 = vweird.f32 %v569
    %vm639 = vweird.f32 %v632
    %vm640 = vmor %vm638, %vm639
    %v641 = vsel %vm640, %v632, %v637
    %v642 = vrsqrt.pop %v570
    %v643 = vmul.f32 %v642, %v570
    %v644 = vmul.f32 %v643, %v642
    %v645 = vmul.f32 0.5, %v644
    %v646 = vsub.f32 1.5, %v645
    %v647 = vmul.f32 %v642, %v646
    %vm648 = vweird.f32 %v570
    %vm649 = vweird.f32 %v642
    %vm650 = vmor %vm648, %vm649
    %v651 = vsel %vm650, %v642, %v647
    %v652 = vrsqrt.pop %v571
    %v653 = vmul.f32 %v652, %v571
    %v654 = vmul.f32 %v653, %v652
    %v655 = vmul.f32 0.5, %v654
    %v656 = vsub.f32 1.5, %v655
    %v657 = vmul.f32 %v652, %v656
    %vm658 = vweird.f32 %v571
    %vm659 = vweird.f32 %v652
    %vm660 = vmor %vm658, %vm659
    %v661 = vsel %vm660, %v652, %v657
    %v662 = vrsqrt.pop %v572
    %v663 = vmul.f32 %v662, %v572
    %v664 = vmul.f32 %v663, %v662
    %v665 = vmul.f32 0.5, %v664
    %v666 = vsub.f32 1.5, %v665
    %v667 = vmul.f32 %v662, %v666
    %vm668 = vweird.f32 %v572
    %vm669 = vweird.f32 %v662
    %vm670 = vmor %vm668, %vm669
    %v671 = vsel %vm670, %v662, %v667
    %v672 = vrsqrt.pop %v573
    %v673 = vmul.f32 %v672, %v573
    %v674 = vmul.f32 %v673, %v672
    %v675 = vmul.f32 0.5, %v674
    %v676 = vsub.f32 1.5, %v675
    %v677 = vmul.f32 %v672, %v676
    %vm678 = vweird.f32 %v573
    %vm679 = vweird.f32 %v672
    %vm680 = vmor %vm678, %vm679
    %v681 = vsel %vm680, %v672, %v677
    %v682 = vrsqrt.pop %v574
    %v683 = vmul.f32 %v682, %v574
    %v684 = vmul.f32 %v683, %v682
    %v685 = vmul.f32 0.5, %v684
    %v686 = vsub.f32 1.5, %v685
    %v687 = vmul.f32 %v682, %v686
    %vm688 = vweird.f32 %v574
    %vm689 = vweird.f32 %v682
    %vm690 = vmor %vm688, %vm689
    %v691 = vsel %vm690, %v682, %v687
    %v692 = vrsqrt.pop %v575
    %v693 = vmul.f32 %v692, %v575
    %v694 = vmul.f32 %v693, %v692
    %v695 = vmul.f32 0.5, %v694
    %v696 = vsub.f32 1.5, %v695
    %v697 = vmul.f32 %v692, %v696
    %vm698 = vweird.f32 %v575
    %vm699 = vweird.f32 %v692
    %vm700 = vmor %vm698, %vm699
    %v701 = vsel %vm700, %v692, %v697
    %v702 = vrsqrt.pop %v576
    %v703 = vmul.f32 %v702, %v576
    %v704 = vmul.f32 %v703, %v702
    %v705 = vmul.f32 0.5, %v704
    %v706 = vsub.f32 1.5, %v705
    %v707 = vmul.f32 %v702, %v706
    %vm708 = vweird.f32 %v576
    %vm709 = vweird.f32 %v702
    %vm710 = vmor %vm708, %vm709
    %v711 = vsel %vm710, %v702, %v707
    %v712 = vrsqrt.pop %v577
    %v713 = vmul.f32 %v712, %v577
    %v714 = vmul.f32 %v713, %v712
    %v715 = vmul.f32 0.5, %v714
    %v716 = vsub.f32 1.5, %v715
    %v717 = vmul.f32 %v712, %v716
    %vm718 = vweird.f32 %v577
    %vm719 = vweird.f32 %v712
    %vm720 = vmor %vm718, %vm719
    %v721 = vsel %vm720, %v712, %v717
    %v722 = vrsqrt.pop %v578
    %v723 = vmul.f32 %v722, %v578
    %v724 = vmul.f32 %v723, %v722
    %v725 = vmul.f32 0.5, %v724
    %v726 = vsub.f32 1.5, %v725
    %v727 = vmul.f32 %v722, %v726
    %vm728 = vweird.f32 %v578
    %vm729 = vweird.f32 %v722
    %vm730 = vmor %vm728, %vm729
    %v731 = vsel %vm730, %v722, %v727
    %v732 = vrsqrt.pop %v579
    %v733 = vmul.f32 %v732, %v579
    %v734 = vmul.f32 %v733, %v732
    %v735 = vmul.f32 0.5, %v734
    %v736 = vsub.f32 1.5, %v735
    %v737 = vmul.f32 %v732, %v736
    %vm738 = vweird.f32 %v579
    %vm739 = vweird.f32 %v732
    %vm740 = vmor %vm738, %vm739
    %v741 = vsel %vm740, %v732, %v737
    %v742 = vrsqrt.pop %v580
    %v743 = vmul.f32 %v742, %v580
    %v744 = vmul.f32 %v743, %v742
    %v745 = vmul.f32 0.5, %v744
    %v746 = vsub.f32 1.5, %v745
    %v747 = vmul.f32 %v742, %v746
    %vm748 = vweird.f32 %v580
    %vm749 = vweird.f32 %v742
    %vm750 = vmor %vm748, %vm749
    %v751 = vsel %vm750, %v742, %v747
    %v752 = vrsqrt.pop %v581
    %v753 = vmul.f32 %v752, %v581
    %v754 = vmul.f32 %v753, %v752
    %v755 = vmul.f32 0.5, %v754
    %v756 = vsub.f32 1.5, %v755
    %v757 = vmul.f32 %v752, %v756
    %vm758 = vweird.f32 %v581
    %vm759 = vweird.f32 %v752
    %vm760 = vmor %vm758, %vm759
    %v761 = vsel %vm760, %v752, %v757
    %v762 = vrsqrt.pop %v582
    %v763 = vmul.f32 %v762, %v582
    %v764 = vmul.f32 %v763, %v762
    %v765 = vmul.f32 0.5, %v764
    %v766 = vsub.f32 1.5, %v765
    %v767 = vmul.f32 %v762, %v766
    %vm768 = vweird.f32 %v582
    %vm769 = vweird.f32 %v762
    %vm770 = vmor %vm768, %vm769
    %v771 = vsel %vm770, %v762, %v767
    %v772 = vrsqrt.pop %v583
    %v773 = vmul.f32 %v772, %v583
    %v774 = vmul.f32 %v773, %v772
    %v775 = vmul.f32 0.5, %v774
    %v776 = vsub.f32 1.5, %v775
    %v777 = vmul.f32 %v772, %v776
    %vm778 = vweird.f32 %v583
    %vm779 = vweird.f32 %v772
    %vm780 = vmor %vm778, %vm779
    %v781 = vsel %vm780, %v772, %v777
    %v782 = vrsqrt.pop %v584
    %v783 = vmul.f32 %v782, %v584
    %v784 = vmul.f32 %v783, %v782
    %v785 = vmul.f32 0.5, %v784
    %v786 = vsub.f32 1.5, %v785
    %v787 = vmul.f32 %v782, %v786
    %vm788 = vweird.f32 %v584
    %vm789 = vweird.f32 %v782
    %vm790 = vmor %vm788, %vm789
    %v791 = vsel %vm790, %v782, %v787
    %v792 = vrsqrt.pop %v585
    %v793 = vmul.f32 %v792, %v585
    %v794 = vmul.f32 %v793, %v792
    %v795 = vmul.f32 0.5, %v794
    %v796 = vsub.f32 1.5, %v795
    %v797 = vmul.f32 %v792, %v796
    %vm798 = vweird.f32 %v585
    %vm799 = vweird.f32 %v792
    %vm800 = vmor %vm798, %vm799
    %v801 = vsel %vm800, %v792, %v797
    %v802 = vrsqrt.pop %v586
    %v803 = vmul.f32 %v802, %v586
    %v804 = vmul.f32 %v803, %v802
    %v805 = vmul.f32 0.5, %v804
    %v806 = vsub.f32 1.5, %v805
    %v807 = vmul.f32 %v802, %v806
    %vm808 = vweird.f32 %v586
    %vm809 = vweird.f32 %v802
    %vm810 = vmor %vm808, %vm809
    %v811 = vsel %vm810, %v802, %v807
    %v812 = vrsqrt.pop %v587
    %v813 = vmul.f32 %v812, %v587
    %v814 = vmul.f32 %v813, %v812
    %v815 = vmul.f32 0.5, %v814
    %v816 = vsub.f32 1.5, %v815
    %v817 = vmul.f32 %v812, %v816
    %vm818 = vweird.f32 %v587
    %vm819 = vweird.f32 %v812
    %vm820 = vmor %vm818, %vm819
    %v821 = vsel %vm820, %v812, %v817
    %v822 = vrsqrt.pop %v588
    %v823 = vmul.f32 %v822, %v588
    %v824 = vmul.f32 %v823, %v822
    %v825 = vmul.f32 0.5, %v824
    %v826 = vsub.f32 1.5, %v825
    %v827 = vmul.f32 %v822, %v826
    %vm828 = vweird.f32 %v588
    %vm829 = vweird.f32 %v822
    %vm830 = vmor %vm828, %vm829
    %v831 = vsel %vm830, %v822, %v827
    %v832 = vrsqrt.pop %v589
    %v833 = vmul.f32 %v832, %v589
    %v834 = vmul.f32 %v833, %v832
    %v835 = vmul.f32 0.5, %v834
    %v836 = vsub.f32 1.5, %v835
    %v837 = vmul.f32 %v832, %v836
    %vm838 = vweird.f32 %v589
    %vm839 = vweird.f32 %v832
    %vm840 = vmor %vm838, %vm839
    %v841 = vsel %vm840, %v832, %v837
    %v842 = vrsqrt.pop %v590
    %v843 = vmul.f32 %v842, %v590
    %v844 = vmul.f32 %v843, %v842
    %v845 = vmul.f32 0.5, %v844
    %v846 = vsub.f32 1.5, %v845
    %v847 = vmul.f32 %v842, %v846
    %vm848 = vweird.f32 %v590
    %vm849 = vweird.f32 %v842
    %vm850 = vmor %vm848, %vm849
    %v851 = vsel %vm850, %v842, %v847
    %v852 = vrsqrt.pop %v591
    %v853 = vmul.f32 %v852, %v591
    %v854 = vmul.f32 %v853, %v852
    %v855 = vmul.f32 0.5, %v854
    %v856 = vsub.f32 1.5, %v855
    %v857 = vmul.f32 %v852, %v856
    %vm858 = vweird.f32 %v591
    %vm859 = vweird.f32 %v852
    %vm860 = vmor %vm858, %vm859
    %v861 = vsel %vm860, %v852, %v857
    %v862 = vrsqrt.pop %v592
    %v863 = vmul.f32 %v862, %v592
    %v864 = vmul.f32 %v863, %v862
    %v865 = vmul.f32 0.5, %v864
    %v866 = vsub.f32 1.5, %v865
    %v867 = vmul.f32 %v862, %v866
    %vm868 = vweird.f32 %v592
    %vm869 = vweird.f32 %v862
    %vm870 = vmor %vm868, %vm869
    %v871 = vsel %vm870, %v862, %v867
    %v872 = vrsqrt.pop %v593
    %v873 = vmul.f32 %v872, %v593
    %v874 = vmul.f32 %v873, %v872
    %v875 = vmul.f32 0.5, %v874
    %v876 = vsub.f32 1.5, %v875
    %v877 = vmul.f32 %v872, %v876
    %vm878 = vweird.f32 %v593
    %vm879 = vweird.f32 %v872
    %vm880 = vmor %vm878, %vm879
    %v881 = vsel %vm880, %v872, %v877
    %v882 = vrsqrt.pop %v594
    %v883 = vmul.f32 %v882, %v594
    %v884 = vmul.f32 %v883, %v882
    %v885 = vmul.f32 0.5, %v884
    %v886 = vsub.f32 1.5, %v885
    %v887 = vmul.f32 %v882, %v886
    %vm888 = vweird.f32 %v594
    %vm889 = vweird.f32 %v882
    %vm890 = vmor %vm888, %vm889
    %v891 = vsel %vm890, %v882, %v887
    %v892 = vrsqrt.pop %v595
    %v893 = vmul.f32 %v892, %v595
    %v894 = vmul.f32 %v893, %v892
    %v895 = vmul.f32 0.5, %v894
    %v896 = vsub.f32 1.5, %v895
    %v897 = vmul.f32 %v892, %v896
    %vm898 = vweird.f32 %v595
    %vm899 = vweird.f32 %v892
    %vm900 = vmor %vm898, %vm899
    %v901 = vsel %vm900, %v892, %v897
    %v902 = vrsqrt.pop %v596
    %v903 = vmul.f32 %v902, %v596
    %v904 = vmul.f32 %v903, %v902
    %v905 = vmul.f32 0.5, %v904
    %v906 = vsub.f32 1.5, %v905
    %v907 = vmul.f32 %v902, %v906
    %vm908 = vweird.f32 %v596
    %vm909 = vweird.f32 %v902
    %vm910 = vmor %vm908, %vm909
    %v911 = vsel %vm910, %v902, %v907
    %v912 = vrsqrt.pop %v597
    %v913 = vmul.f32 %v912, %v597
    %v914 = vmul.f32 %v913, %v912
    %v915 = vmul.f32 0.5, %v914
    %v916 = vsub.f32 1.5, %v915
    %v917 = vmul.f32 %v912, %v916
    %vm918 = vweird.f32 %v597
    %vm919 = vweird.f32 %v912
    %vm920 = vmor %vm918, %vm919
    %v921 = vsel %vm920, %v912, %v917
    %v922 = vrsqrt.pop %v598
    %v923 = vmul.f32 %v922, %v598
    %v924 = vmul.f32 %v923, %v922
    %v925 = vmul.f32 0.5, %v924
    %v926 = vsub.f32 1.5, %v925
    %v927 = vmul.f32 %v922, %v926
    %vm928 = vweird.f32 %v598
    %vm929 = vweird.f32 %v922
    %vm930 = vmor %vm928, %vm929
    %v931 = vsel %vm930, %v922, %v927
    %v932 = vrsqrt.pop %v599
    %v933 = vmul.f32 %v932, %v599
    %v934 = vmul.f32 %v933, %v932
    %v935 = vmul.f32 0.5, %v934
    %v936 = vsub.f32 1.5, %v935
    %v937 = vmul.f32 %v932, %v936
    %vm938 = vweird.f32 %v599
    %vm939 = vweird.f32 %v932
    %vm940 = vmor %vm938, %vm939
    %v941 = vsel %vm940, %v932, %v937
    %v942 = vrsqrt.pop %v600
    %v943 = vmul.f32 %v942, %v600
    %v944 = vmul.f32 %v943, %v942
    %v945 = vmul.f32 0.5, %v944
    %v946 = vsub.f32 1.5, %v945
    %v947 = vmul.f32 %v942, %v946
    %vm948 = vweird.f32 %v600
    %vm949 = vweird.f32 %v942
    %vm950 = vmor %vm948, %vm949
    %v951 = vsel %vm950, %v942, %v947
    %v952 = vrsqrt.pop %v601
    %v953 = vmul.f32 %v952, %v601
    %v954 = vmul.f32 %v953, %v952
    %v955 = vmul.f32 0.5, %v954
    %v956 = vsub.f32 1.5, %v955
    %v957 = vmul.f32 %v952, %v956
    %vm958 = vweird.f32 %v601
    %vm959 = vweird.f32 %v952
    %vm960 = vmor %vm958, %vm959
    %v961 = vsel %vm960, %v952, %v957
    %v962 = vmul.f32 %v611, 0.1
    %v963 = vmul.f32 %v621, 0.1
    %v964 = vmul.f32 %v631, 0.1
    %v965 = vmul.f32 %v641, 0.1
    %v966 = vmul.f32 %v651, 0.1
    %v967 = vmul.f32 %v661, 0.1
    %v968 = vmul.f32 %v671, 0.1
    %v969 = vmul.f32 %v681, 0.1
    %v970 = vmul.f32 %v691, 0.1
    %v971 = vmul.f32 %v701, 0.1
    %v972 = vmul.f32 %v711, 0.1
    %v973 = vmul.f32 %v721, 0.1
    %v974 = vmul.f32 %v731, 0.1
    %v975 = vmul.f32 %v741, 0.1
    %v976 = vmul.f32 %v751, 0.1
    %v977 = vmul.f32 %v761, 0.1
    %v978 = vmul.f32 %v771, 0.1
    %v979 = vmul.f32 %v781, 0.1
    %v980 = vmul.f32 %v791, 0.1
    %v981 = vmul.f32 %v801, 0.1
    %v982 = vmul.f32 %v811, 0.1
    %v983 = vmul.f32 %v821, 0.1
    %v984 = vmul.f32 %v831, 0.1
    %v985 = vmul.f32 %v841, 0.1
    %v986 = vmul.f32 %v851, 0.1
    %v987 = vmul.f32 %v861, 0.1
    %v988 = vmul.f32 %v871, 0.1
    %v989 = vmul.f32 %v881, 0.1
    %v990 = vmul.f32 %v891, 0.1
    %v991 = vmul.f32 %v901, 0.1
    %v992 = vmul.f32 %v911, 0.1
    %v993 = vmul.f32 %v921, 0.1
    %v994 = vmul.f32 %v931, 0.1
    %v995 = vmul.f32 %v941, 0.1
    %v996 = vmul.f32 %v951, 0.1
    %v997 = vmul.f32 %v961, 0.1
    %v998 = vmul.f32 %v25, %v962
    %v999 = vmul.f32 %v26, %v963
    %v1000 = vmul.f32 %v27, %v962
    %v1001 = vmul.f32 %v28, %v963
    %v1002 = vmul.f32 %v29, %v962
    %v1003 = vmul.f32 %v30, %v963
    %v1004 = vmul.f32 %v31, %v964
    %v1005 = vmul.f32 %v32, %v965
    %v1006 = vmul.f32 %v33, %v964
    %v1007 = vmul.f32 %v34, %v965
    %v1008 = vmul.f32 %v35, %v964
    %v1009 = vmul.f32 %v36, %v965
    %v1010 = vmul.f32 %v37, %v966
    %v1011 = vmul.f32 %v38, %v967
    %v1012 = vmul.f32 %v39, %v966
    %v1013 = vmul.f32 %v40, %v967
    %v1014 = vmul.f32 %v41, %v966
    %v1015 = vmul.f32 %v42, %v967
    %v1016 = vmul.f32 %v43, %v968
    %v1017 = vmul.f32 %v44, %v969
    %v1018 = vmul.f32 %v45, %v968
    %v1019 = vmul.f32 %v46, %v969
    %v1020 = vmul.f32 %v47, %v968
    %v1021 = vmul.f32 %v48, %v969
    %v1022 = vmul.f32 %v49, %v970
    %v1023 = vmul.f32 %v50, %v971
    %v1024 = vmul.f32 %v51, %v970
    %v1025 = vmul.f32 %v52, %v971
    %v1026 = vmul.f32 %v53, %v970
    %v1027 = vmul.f32 %v54, %v971
    %v1028 = vmul.f32 %v55, %v972
    %v1029 = vmul.f32 %v56, %v973
    %v1030 = vmul.f32 %v57, %v972
    %v1031 = vmul.f32 %v58, %v973
    %v1032 = vmul.f32 %v59, %v972
    %v1033 = vmul.f32 %v60, %v973
    %v1034 = vmul.f32 %v61, %v974
    %v1035 = vmul.f32 %v62, %v975
    %v1036 = vmul.f32 %v63, %v974
    %v1037 = vmul.f32 %v64, %v975
    %v1038 = vmul.f32 %v65, %v974
    %v1039 = vmul.f32 %v66, %v975
    %v1040 = vmul.f32 %v67, %v976
    %v1041 = vmul.f32 %v68, %v977
    %v1042 = vmul.f32 %v69, %v976
    %v1043 = vmul.f32 %v70, %v977
    %v1044 = vmul.f32 %v71, %v976
    %v1045 = vmul.f32 %v72, %v977
    %v1046 = vmul.f32 %v73, %v978
    %v1047 = vmul.f32 %v74, %v979
    %v1048 = vmul.f32 %v75, %v978
    %v1049 = vmul.f32 %v76, %v979
    %v1050 = vmul.f32 %v77, %v978
    %v1051 = vmul.f32 %v78, %v979
    %v1052 = vmul.f32 %v79, %v980
    %v1053 = vmul.f32 %v80, %v981
    %v1054 = vmul.f32 %v81, %v980
    %v1055 = vmul.f32 %v82, %v981
    %v1056 = vmul.f32 %v83, %v980
    %v1057 = vmul.f32 %v84, %v981
    %v1058 = vmul.f32 %v85, %v982
    %v1059 = vmul.f32 %v86, %v983
    %v1060 = vmul.f32 %v87, %v982
    %v1061 = vmul.f32 %v88, %v983
    %v1062 = vmul.f32 %v89, %v982
    %v1063 = vmul.f32 %v90, %v983
    %v1064 = vmul.f32 %v91, %v984
    %v1065 = vmul.f32 %v92, %v985
    %v1066 = vmul.f32 %v93, %v984
    %v1067 = vmul.f32 %v94, %v985
    %v1068 = vmul.f32 %v95, %v984
    %v1069 = vmul.f32 %v96, %v985
    %v1070 = vmul.f32 %v97, %v986
    %v1071 = vmul.f32 %v98, %v987
    %v1072 = vmul.f32 %v99, %v986
    %v1073 = vmul.f32 %v100, %v987
    %v1074 = vmul.f32 %v101, %v986
    %v1075 = vmul.f32 %v102, %v987
    %v1076 = vmul.f32 %v103, %v988
    %v1077 = vmul.f32 %v104, %v989
    %v1078 = vmul.f32 %v105, %v988
    %v1079 = vmul.f32 %v106, %v989
    %v1080 = vmul.f32 %v107, %v988
    %v1081 = vmul.f32 %v108, %v989
    %v1082 = vmul.f32 %v109, %v990
    %v1083 = vmul.f32 %v110, %v991
    %v1084 = vmul.f32 %v111, %v990
    %v1085 = vmul.f32 %v112, %v991
    %v1086 = vmul.f32 %v113, %v990
    %v1087 = vmul.f32 %v114, %v991
    %v1088 = vmul.f32 %v115, %v992
    %v1089 = vmul.f32 %v116, %v993
    %v1090 = vmul.f32 %v117, %v992
    %v1091 = vmul.f32 %v118, %v993
    %v1092 = vmul.f32 %v119, %v992
    %v1093 = vmul.f32 %v120, %v993
    %v1094 = vmul.f32 %v121, %v994
    %v1095 = vmul.f32 %v122, %v995
    %v1096 = vmul.f32 %v123, %v994
    %v1097 = vmul.f32 %v124, %v995
    %v1098 = vmul.f32 %v125, %v994
    %v1099 = vmul.f32 %v126, %v995
    %v1100 = vmul.f32 %v127, %v996
    %v1101 = vmul.f32 %v128, %v997
    %v1102 = vmul.f32 %v129, %v996
    %v1103 = vmul.f32 %v130, %v997
    %v1104 = vmul.f32 %v131, %v996
    %v1105 = vmul.f32 %v132, %v997
    %1106 = vst [vmem:[#allocation5] sm:$0xff] %v998
    %1107 = vst [vmem:[#allocation5 + $0x8] sm:$0xff] %v999
    %1108 = vst [vmem:[#allocation5 + $0x10] sm:$0xff] %v1000
    %1109 = vst [vmem:[#allocation5 + $0x18] sm:$0xff] %v1001
    %1110 = vst [vmem:[#allocation5 + $0x20] sm:$0xf] %v1002
    %1111 = vst [vmem:[#allocation5 + $0x28] sm:$0xf] %v1003
    %1112 = vst [vmem:[#allocation5 + $0x30] sm:$0xff] %v1004
    %1113 = vst [vmem:[#allocation5 + $0x38] sm:$0xff] %v1005
    %1114 = vst [vmem:[#allocation5 + $0x40] sm:$0xff] %v1006
    %1115 = vst [vmem:[#allocation5 + $0x48] sm:$0xff] %v1007
    %1116 = vst [vmem:[#allocation5 + $0x50] sm:$0xf] %v1008
    %1117 = vst [vmem:[#allocation5 + $0x58] sm:$0xf] %v1009
    %1118 = vst [vmem:[#allocation5 + $0x60] sm:$0xff] %v1010
    %1119 = vst [vmem:[#allocation5 + $0x68] sm:$0xff] %v1011
    %1120 = vst [vmem:[#allocation5 + $0x70] sm:$0xff] %v1012
    %1121 = vst [vmem:[#allocation5 + $0x78] sm:$0xff] %v1013
    %1122 = vst [vmem:[#allocation5 + $0x80] sm:$0xf] %v1014
    %1123 = vst [vmem:[#allocation5 + $0x88] sm:$0xf] %v1015
    %1124 = vst [vmem:[#allocation5 + $0x90] sm:$0xff] %v1016
    %1125 = vst [vmem:[#allocation5 + $0x98] sm:$0xff] %v1017
    %1126 = vst [vmem:[#allocation5 + $0xa0] sm:$0xff] %v1018
    %1127 = vst [vmem:[#allocation5 + $0xa8] sm:$0xff] %v1019
    %1128 = vst [vmem:[#allocation5 + $0xb0] sm:$0xf] %v1020
    %1129 = vst [vmem:[#allocation5 + $0xb8] sm:$0xf] %v1021
    %1130 = vst [vmem:[#allocation5 + $0xc0] sm:$0xff] %v1022
    %1131 = vst [vmem:[#allocation5 + $0xc8] sm:$0xff] %v1023
    %1132 = vst [vmem:[#allocation5 + $0xd0] sm:$0xff] %v1024
    %1133 = vst [vmem:[#allocation5 + $0xd8] sm:$0xff] %v1025
    %1134 = vst [vmem:[#allocation5 + $0xe0] sm:$0xf] %v1026
    %1135 = vst [vmem:[#allocation5 + $0xe8] sm:$0xf] %v1027
    %1136 = vst [vmem:[#allocation5 + $0xf0] sm:$0xff] %v1028
    %1137 = vst [vmem:[#allocation5 + $0xf8] sm:$0xff] %v1029
    %1138 = vst [vmem:[#allocation5 + $0x100] sm:$0xff] %v1030
    %1139 = vst [vmem:[#allocation5 + $0x108] sm:$0xff] %v1031
    %1140 = vst [vmem:[#allocation5 + $0x110] sm:$0xf] %v1032
    %1141 = vst [vmem:[#allocation5 + $0x118] sm:$0xf] %v1033
    %1142 = vst [vmem:[#allocation5 + $0x120] sm:$0xff] %v1034
    %1143 = vst [vmem:[#allocation5 + $0x128] sm:$0xff] %v1035
    %1144 = vst [vmem:[#allocation5 + $0x130] sm:$0xff] %v1036
    %1145 = vst [vmem:[#allocation5 + $0x138] sm:$0xff] %v1037
    %1146 = vst [vmem:[#allocation5 + $0x140] sm:$0xf] %v1038
    %1147 = vst [vmem:[#allocation5 + $0x148] sm:$0xf] %v1039
    %1148 = vst [vmem:[#allocation5 + $0x150] sm:$0xff] %v1040
    %1149 = vst [vmem:[#allocation5 + $0x158] sm:$0xff] %v1041
    %1150 = vst [vmem:[#allocation5 + $0x160] sm:$0xff] %v1042
    %1151 = vst [vmem:[#allocation5 + $0x168] sm:$0xff] %v1043
    %1152 = vst [vmem:[#allocation5 + $0x170] sm:$0xf] %v1044
    %1153 = vst [vmem:[#allocation5 + $0x178] sm:$0xf] %v1045
    %1154 = vst [vmem:[#allocation5 + $0x180] sm:$0xff] %v1046
    %1155 = vst [vmem:[#allocation5 + $0x188] sm:$0xff] %v1047
    %1156 = vst [vmem:[#allocation5 + $0x190] sm:$0xff] %v1048
    %1157 = vst [vmem:[#allocation5 + $0x198] sm:$0xff] %v1049
    %1158 = vst [vmem:[#allocation5 + $0x1a0] sm:$0xf] %v1050
    %1159 = vst [vmem:[#allocation5 + $0x1a8] sm:$0xf] %v1051
    %1160 = vst [vmem:[#allocation5 + $0x1b0] sm:$0xff] %v1052
    %1161 = vst [vmem:[#allocation5 + $0x1b8] sm:$0xff] %v1053
    %1162 = vst [vmem:[#allocation5 + $0x1c0] sm:$0xff] %v1054
    %1163 = vst [vmem:[#allocation5 + $0x1c8] sm:$0xff] %v1055
    %1164 = vst [vmem:[#allocation5 + $0x1d0] sm:$0xf] %v1056
    %1165 = vst [vmem:[#allocation5 + $0x1d8] sm:$0xf] %v1057
    %1166 = vst [vmem:[#allocation5 + $0x1e0] sm:$0xff] %v1058
    %1167 = vst [vmem:[#allocation5 + $0x1e8] sm:$0xff] %v1059
    %1168 = vst [vmem:[#allocation5 + $0x1f0] sm:$0xff] %v1060
    %1169 = vst [vmem:[#allocation5 + $0x1f8] sm:$0xff] %v1061
    %1170 = vst [vmem:[#allocation5 + $0x200] sm:$0xf] %v1062
    %1171 = vst [vmem:[#allocation5 + $0x208] sm:$0xf] %v1063
    %1172 = vst [vmem:[#allocation5 + $0x210] sm:$0xff] %v1064
    %1173 = vst [vmem:[#allocation5 + $0x218] sm:$0xff] %v1065
    %1174 = vst [vmem:[#allocation5 + $0x220] sm:$0xff] %v1066
    %1175 = vst [vmem:[#allocation5 + $0x228] sm:$0xff] %v1067
    %1176 = vst [vmem:[#allocation5 + $0x230] sm:$0xf] %v1068
    %1177 = vst [vmem:[#allocation5 + $0x238] sm:$0xf] %v1069
    %1178 = vst [vmem:[#allocation5 + $0x240] sm:$0xff] %v1070
    %1179 = vst [vmem:[#allocation5 + $0x248] sm:$0xff] %v1071
    %1180 = vst [vmem:[#allocation5 + $0x250] sm:$0xff] %v1072
    %1181 = vst [vmem:[#allocation5 + $0x258] sm:$0xff] %v1073
    %1182 = vst [vmem:[#allocation5 + $0x260] sm:$0xf] %v1074
    %1183 = vst [vmem:[#allocation5 + $0x268] sm:$0xf] %v1075
    %1184 = vst [vmem:[#allocation5 + $0x270] sm:$0xff] %v1076
    %1185 = vst [vmem:[#allocation5 + $0x278] sm:$0xff] %v1077
    %1186 = vst [vmem:[#allocation5 + $0x280] sm:$0xff] %v1078
    %1187 = vst [vmem:[#allocation5 + $0x288] sm:$0xff] %v1079
    %1188 = vst [vmem:[#allocation5 + $0x290] sm:$0xf] %v1080
    %1189 = vst [vmem:[#allocation5 + $0x298] sm:$0xf] %v1081
    %1190 = vst [vmem:[#allocation5 + $0x2a0] sm:$0xff] %v1082
    %1191 = vst [vmem:[#allocation5 + $0x2a8] sm:$0xff] %v1083
    %1192 = vst [vmem:[#allocation5 + $0x2b0] sm:$0xff] %v1084
    %1193 = vst [vmem:[#allocation5 + $0x2b8] sm:$0xff] %v1085
    %1194 = vst [vmem:[#allocation5 + $0x2c0] sm:$0xf] %v1086
    %1195 = vst [vmem:[#allocation5 + $0x2c8] sm:$0xf] %v1087
    %1196 = vst [vmem:[#allocation5 + $0x2d0] sm:$0xff] %v1088
    %1197 = vst [vmem:[#allocation5 + $0x2d8] sm:$0xff] %v1089
    %1198 = vst [vmem:[#allocation5 + $0x2e0] sm:$0xff] %v1090
    %1199 = vst [vmem:[#allocation5 + $0x2e8] sm:$0xff] %v1091
    %1200 = vst [vmem:[#allocation5 + $0x2f0] sm:$0xf] %v1092
    %1201 = vst [vmem:[#allocation5 + $0x2f8] sm:$0xf] %v1093
    %1202 = vst [vmem:[#allocation5 + $0x300] sm:$0xff] %v1094
    %1203 = vst [vmem:[#allocation5 + $0x308] sm:$0xff] %v1095
    %1204 = vst [vmem:[#allocation5 + $0x310] sm:$0xff] %v1096
    %1205 = vst [vmem:[#allocation5 + $0x318] sm:$0xff] %v1097
    %1206 = vst [vmem:[#allocation5 + $0x320] sm:$0xf] %v1098
    %1207 = vst [vmem:[#allocation5 + $0x328] sm:$0xf] %v1099
    %1208 = vst [vmem:[#allocation5 + $0x330] sm:$0xff] %v1100
    %1209 = vst [vmem:[#allocation5 + $0x338] sm:$0xff] %v1101
    %1210 = vst [vmem:[#allocation5 + $0x340] sm:$0xff] %v1102
    %1211 = vst [vmem:[#allocation5 + $0x348] sm:$0xff] %v1103
    %1212 = vst [vmem:[#allocation5 + $0x350] sm:$0xf] %v1104
    %1213 = vst [vmem:[#allocation5 + $0x358] sm:$0xf] %v1105
    // Predicated region
    $region10: #{tpu_custom_call.1} parent=1 // pred_check
      _
    $region11: #{tpu_custom_call.1} parent=1 // pred_check_branch
      %1215 = sbr.rel (0) target = $region13
    $region12: #{tpu_custom_call.1} parent=1 // pred_region
      %1217 = vsyncadd [#allocation4], 0
      %s1218 = sshll.u32 [#allocation5], 4
      %s1219 = int_to_ptr.vmem [resolvable:$true] %s1218
      %s1220 = sshll.u32 %s1, 4
      %s1221 = int_to_ptr.hbm [resolvable:$true] %s1220
      %1226 = dma.vmem_to_hbm [thread:$0]  %s1219, 13824, %s1221, [#allocation4], 256, 256, 16
    $region13: #{tpu_custom_call.1} parent=1 // pred_fallthru
      _
    // Predicated region
    $region14: #{tpu_custom_call.1} parent=1 // pred_check
      _
    $region15: #{tpu_custom_call.1} parent=1 // pred_check_branch
      %1228 = sbr.rel (0) target = $region17
    $region16: #{tpu_custom_call.1} parent=1 // pred_region
      %1230 = dma.done [#allocation4], 13824
    $region17: #{tpu_custom_call.1} parent=1 // pred_fallthru
      _
    %1231 = vsyncpa [#allocation3], 1
    %1232 = vsyncpa [#allocation4], 1

</llo_original>
